<compile_context>
chip_gen: v7x
topology: tpu7x:2x2x1
jax: 0.10.0
libtpu: 0.0.40
codegen_flags: <defaults>
</compile_context>

<pallas_src>
import functools

import jax
import jax.numpy as jnp
from jax import lax
from jax.experimental import pallas as pl
from jax.experimental.pallas import tpu as pltpu


def _score_kernel(emb_ref, hproj_ref, we_ref, ws_ref, mask_ref, out_ref):
    # emb_ref  : (1, TL, I)  embeddings tile (input dtype)
    # hproj_ref: (1, 1, H)   f32  per-batch hidden projection (+ attn bias)
    # we_ref   : (H, I)      compute-dtype embedding half of W_attn (resident)
    # ws_ref   : (1, H)      f32  score weight row (resident)
    # mask_ref : (1, 1, TL)  int32 (1 = masked)
    # out_ref  : (1, 1, TL)  f32
    emb = emb_ref[0]                                       # (TL, I)

    # Big matmul on the MXU: contract I of emb with I of W_e (no weight
    # transpose materialized), f32 accumulation.
    energy = lax.dot_general(
        emb.astype(we_ref.dtype), we_ref[...],
        dimension_numbers=(((1,), (1,)), ((), ())),
        preferred_element_type=jnp.float32)                # (TL, H)

    # Add the per-batch hidden projection (+ bias) and tanh (EUP) in f32.
    energy = jnp.tanh(energy + hproj_ref[0])               # (TL, H)

    # Contract H with the score row; result is already lane-dense (1, TL).
    s = lax.dot_general(
        ws_ref[...], energy,
        dimension_numbers=(((1,), (1,)), ((), ())),
        preferred_element_type=jnp.float32)                # (1, TL)

    # masked_fill_(num_mask, -1e12) in f32.
    s = jnp.where(mask_ref[0] != 0, jnp.float32(-1.0e12), s)
    out_ref[0] = s.astype(out_ref.dtype)


def _pick_seq_tile(max_len: int, row_bytes: int) -> int:
    """Sequence-tile length: full sequence if it is small, otherwise a
    128-multiple tile so one (double-buffered) embeddings tile stays ~<=8 MiB."""
    budget = 4 * 1024 * 1024                 # bytes per single input buffer
    if max_len * row_bytes <= 2 * budget:
        return max_len
    tl = budget // max(row_bytes, 1)
    tl = max(128, min(2048, (tl // 128) * 128))
    return min(tl, max_len)


@functools.partial(jax.jit, static_argnames=("compute_dtype",))
def score_forward(hidden, num_embeddings, w_attn, b_attn, w_score,
                  num_mask=None, *, compute_dtype=jnp.bfloat16):
    """
    hidden:         (B, 1, H)     float
    num_embeddings: (B, L, I)     float   (pass bf16 to also halve HBM traffic)
    w_attn:         (H, H + I)    PyTorch nn.Linear(hidden+input, hidden) weight
    b_attn:         (H,)
    w_score:        (1, H)        PyTorch nn.Linear(hidden, 1, bias=False) weight
    num_mask:       (B, L) bool/int or None
    returns:        (B, L) float32
    """
    B, max_len, input_size = num_embeddings.shape
    H = hidden.shape[-1]

    # --- tiny per-batch glue in plain JAX (no broadcast+concat of hidden) ---
    # cat order in the module is (hidden, emb) -> W_attn columns are [H | I].
    w_h = w_attn[:, :H]                                    # (H, H)
    w_e = w_attn[:, H:]                                    # (H, I)
    h2 = hidden.reshape(B, H).astype(jnp.float32)
    hidden_proj = (jnp.einsum("bh,oh->bo", h2, w_h.astype(jnp.float32))
                   + b_attn.astype(jnp.float32)).reshape(B, 1, H)

    we = w_e.astype(compute_dtype)                         # (H, I), VMEM-resident
    ws = w_score.reshape(1, H).astype(jnp.float32)         # (1, H)

    if num_mask is None:
        mask = jnp.zeros((B, 1, max_len), jnp.int32)
    else:
        mask = num_mask.astype(jnp.int32).reshape(B, 1, max_len)

    TL = _pick_seq_tile(max_len, input_size * num_embeddings.dtype.itemsize)
    grid = (B, pl.cdiv(max_len, TL))

    out = pl.pallas_call(
        _score_kernel,
        out_shape=jax.ShapeDtypeStruct((B, 1, max_len), jnp.float32),
        grid_spec=pltpu.PrefetchScalarGridSpec(
            num_scalar_prefetch=0,
            grid=grid,
            in_specs=[
                pl.BlockSpec((1, TL, input_size), lambda b, l: (b, l, 0)),
                pl.BlockSpec((1, 1, H), lambda b, l: (b, 0, 0)),
                pl.BlockSpec((H, input_size), lambda b, l: (0, 0)),
                pl.BlockSpec((1, H), lambda b, l: (0, 0)),
                pl.BlockSpec((1, 1, TL), lambda b, l: (b, 0, l)),
            ],
            out_specs=pl.BlockSpec((1, 1, TL), lambda b, l: (b, 0, l)),
        ),
        compiler_params=pltpu.CompilerParams(
            dimension_semantics=("parallel", "parallel"),
            vmem_limit_bytes=32 * 1024 * 1024,
        ),
    )(num_embeddings, hidden_proj, we, ws, mask)

    return out.reshape(B, max_len)


if __name__ == "__main__":
    # Small shapes consistent with the module's forward pass.
    B, max_len = 2, 8
    input_size, hidden_size = 32, 32

    key = jax.random.PRNGKey(0)
    k1, k2, k3, k4, k5, k6 = jax.random.split(key, 6)

    # Deterministic parameter init (PyTorch-Linear-style uniform bounds).
    fan_attn = hidden_size + input_size
    bound_attn = 1.0 / jnp.sqrt(fan_attn)
    w_attn = jax.random.uniform(k1, (hidden_size, fan_attn), jnp.float32,
                                -bound_attn, bound_attn)
    b_attn = jax.random.uniform(k2, (hidden_size,), jnp.float32,
                                -bound_attn, bound_attn)
    bound_score = 1.0 / jnp.sqrt(hidden_size)
    w_score = jax.random.uniform(k3, (1, hidden_size), jnp.float32,
                                 -bound_score, bound_score)

    # Inputs.
    hidden = jax.random.normal(k4, (B, 1, hidden_size), jnp.float32)
    num_embeddings = jax.random.normal(k5, (B, max_len, input_size), jnp.float32)
    num_mask = jax.random.bernoulli(k6, 0.25, (B, max_len))

    # Pure-JAX reference (matches the PyTorch forward).
    hid_rep = jnp.broadcast_to(hidden, (B, max_len, hidden_size))
    ein = jnp.concatenate([hid_rep, num_embeddings], axis=2).reshape(-1, fan_attn)
    ref_unmasked = (jnp.tanh(ein @ w_attn.T + b_attn) @ w_score.T).reshape(B, max_len)
    ref = jnp.where(num_mask, -1.0e12, ref_unmasked)

    # f32 compute path (exact semantics) -- tight tolerance.
    score_f32 = jax.block_until_ready(
        score_forward(hidden, num_embeddings, w_attn, b_attn, w_score, num_mask,
                      compute_dtype=jnp.float32))
    assert score_f32.shape == (B, max_len)
    assert jnp.allclose(score_f32, ref, atol=2e-3, rtol=2e-3)

    # Default bf16-MXU path (review-recommended on v5e/v6e/v7x) -- looser tolerance.
    score_bf16 = jax.block_until_ready(
        score_forward(hidden, num_embeddings, w_attn, b_attn, w_score, num_mask))
    assert score_bf16.shape == (B, max_len)
    assert jnp.allclose(score_bf16, ref, atol=3e-2, rtol=3e-2)

    # num_mask=None branch.
    score_nomask = jax.block_until_ready(
        score_forward(hidden, num_embeddings, w_attn, b_attn, w_score, None,
                      compute_dtype=jnp.float32))
    assert jnp.allclose(score_nomask, ref_unmasked, atol=2e-3, rtol=2e-3)

    print("KERNEL_OK")
</pallas_src>

<mosaic_0001>
module attributes {stable_mosaic.version = 11 : i64} {
  func.func @_score_kernel(%arg0: i32, %arg1: i32, %arg2: memref<1x8x32xf32, #tpu.memory_space<vmem>>, %arg3: memref<1x1x32xf32, #tpu.memory_space<vmem>>, %arg4: memref<32x32xf32, #tpu.memory_space<vmem>>, %arg5: memref<1x32xf32, #tpu.memory_space<vmem>>, %arg6: memref<1x1x8xi32, #tpu.memory_space<vmem>>, %arg7: memref<1x1x8xf32, #tpu.memory_space<vmem>>) attributes {dimension_semantics = [#tpu.dimension_semantics<parallel>, #tpu.dimension_semantics<parallel>], iteration_bounds = array<i64: 2, 1>, scalar_prefetch = 0 : i64, scratch_operands = 0 : i64, tpu.core_type = #tpu.core_type<tc>, window_params = [{transform_indices = @transform_0, window_bounds = array<i64: 1, 8, 32>}, {transform_indices = @transform_1, window_bounds = array<i64: 1, 1, 32>}, {pipeline_mode = #tpu.pipeline_mode<synchronous>, transform_indices = @transform_2, window_bounds = array<i64: 32, 32>}, {pipeline_mode = #tpu.pipeline_mode<synchronous>, transform_indices = @transform_3, window_bounds = array<i64: 1, 32>}, {transform_indices = @transform_4, window_bounds = array<i64: 1, 1, 8>}, {transform_indices = @transform_5, window_bounds = array<i64: 1, 1, 8>}]} {
    %c0 = arith.constant 0 : index
    %c0_0 = arith.constant 0 : index
    %c0_1 = arith.constant 0 : index
    %0 = vector.load %arg2[%c0, %c0_0, %c0_1] : memref<1x8x32xf32, #tpu.memory_space<vmem>>, vector<1x8x32xf32>
    %1 = vector.shape_cast %0 : vector<1x8x32xf32> to vector<8x32xf32>
    %c0_2 = arith.constant 0 : index
    %c0_3 = arith.constant 0 : index
    %2 = vector.load %arg4[%c0_2, %c0_3] : memref<32x32xf32, #tpu.memory_space<vmem>>, vector<32x32xf32>
    %cst = arith.constant dense<0.000000e+00> : vector<8x32xf32>
    %3 = tpu.matmul %1, %2, %cst {dimension_numbers = #tpu.dot_dimension_numbers<[1], [1], [0], [0], [0, 0, 1, 0], [], []>} : vector<8x32xf32>, vector<32x32xf32>, vector<8x32xf32> -> vector<8x32xf32>
    %c0_4 = arith.constant 0 : index
    %c0_5 = arith.constant 0 : index
    %c0_6 = arith.constant 0 : index
    %4 = vector.load %arg3[%c0_4, %c0_5, %c0_6] : memref<1x1x32xf32, #tpu.memory_space<vmem>>, vector<1x1x32xf32>
    %5 = vector.shape_cast %4 : vector<1x1x32xf32> to vector<1x32xf32>
    %6 = vector.broadcast %5 : vector<1x32xf32> to vector<8x32xf32>
    %7 = arith.addf %3, %6 : vector<8x32xf32>
    %8 = math.tanh %7 : vector<8x32xf32>
    %c0_7 = arith.constant 0 : index
    %c0_8 = arith.constant 0 : index
    %9 = vector.load %arg5[%c0_7, %c0_8] : memref<1x32xf32, #tpu.memory_space<vmem>>, vector<1x32xf32>
    %cst_9 = arith.constant dense<0.000000e+00> : vector<1x8xf32>
    %10 = tpu.matmul %9, %8, %cst_9 {dimension_numbers = #tpu.dot_dimension_numbers<[1], [1], [0], [0], [0, 0, 1, 0], [], []>} : vector<1x32xf32>, vector<8x32xf32>, vector<1x8xf32> -> vector<1x8xf32>
    %c0_10 = arith.constant 0 : index
    %c0_11 = arith.constant 0 : index
    %c0_12 = arith.constant 0 : index
    %11 = vector.load %arg6[%c0_10, %c0_11, %c0_12] : memref<1x1x8xi32, #tpu.memory_space<vmem>>, vector<1x1x8xi32>
    %12 = vector.shape_cast %11 : vector<1x1x8xi32> to vector<1x8xi32>
    %c0_i32 = arith.constant 0 : i32
    %13 = vector.broadcast %c0_i32 : i32 to vector<1x8xi32>
    %14 = arith.cmpi ne, %12, %13 : vector<1x8xi32>
    %cst_13 = arith.constant -9.99999995E+11 : f32
    %15 = vector.broadcast %cst_13 : f32 to vector<1x8xf32>
    %16 = arith.select %14, %15, %10 : vector<1x8xi1>, vector<1x8xf32>
    %c0_14 = arith.constant 0 : index
    %c0_15 = arith.constant 0 : index
    %c0_16 = arith.constant 0 : index
    %17 = vector.load %arg7[%c0_14, %c0_15, %c0_16] : memref<1x1x8xf32, #tpu.memory_space<vmem>>, vector<1x1x8xf32>
    %18 = vector.shape_cast %17 : vector<1x1x8xf32> to vector<1x8xf32>
    %19 = vector.shape_cast %16 : vector<1x8xf32> to vector<1x1x8xf32>
    tpu.vector_store %arg7[%c0_14, %c0_15, %c0_16], %19 {strides = array<i32>} : memref<1x1x8xf32, #tpu.memory_space<vmem>>, vector<1x1x8xf32>,
    return
  }
  func.func @transform_0(%arg0: i32, %arg1: i32) -> (i32, i32, i32) {
    %c0_i32 = arith.constant 0 : i32
    %c0_i32_0 = arith.constant 0 : i32
    return %arg0, %arg1, %c0_i32 : i32, i32, i32
  }
  func.func @transform_1(%arg0: i32, %arg1: i32) -> (i32, i32, i32) {
    %c0_i32 = arith.constant 0 : i32
    %c0_i32_0 = arith.constant 0 : i32
    %c0_i32_1 = arith.constant 0 : i32
    return %arg0, %c0_i32, %c0_i32_0 : i32, i32, i32
  }
  func.func @transform_2(%arg0: i32, %arg1: i32) -> (i32, i32) {
    %c0_i32 = arith.constant 0 : i32
    %c0_i32_0 = arith.constant 0 : i32
    %c0_i32_1 = arith.constant 0 : i32
    return %c0_i32, %c0_i32_0 : i32, i32
  }
  func.func @transform_3(%arg0: i32, %arg1: i32) -> (i32, i32) {
    %c0_i32 = arith.constant 0 : i32
    %c0_i32_0 = arith.constant 0 : i32
    %c0_i32_1 = arith.constant 0 : i32
    return %c0_i32, %c0_i32_0 : i32, i32
  }
  func.func @transform_4(%arg0: i32, %arg1: i32) -> (i32, i32, i32) {
    %c0_i32 = arith.constant 0 : i32
    %c0_i32_0 = arith.constant 0 : i32
    return %arg0, %c0_i32, %arg1 : i32, i32, i32
  }
  func.func @transform_5(%arg0: i32, %arg1: i32) -> (i32, i32, i32) {
    %c0_i32 = arith.constant 0 : i32
    %c0_i32_0 = arith.constant 0 : i32
    return %arg0, %c0_i32, %arg1 : i32, i32, i32
  }
}

</mosaic_0001>

<llo_original>
// kernel: score_forward.1
$region0: #{score_forward.1}
  #allocation0 [shape = 'u32[]', space=smem, size = 0x4, offset = 0x4, fixed_abs, tag = 'smem constant byte address 0x4 - core index']
  #allocation1 [shape = 'u32[144,128]{1,0:T(1,128)}', space=vmem, size = 0x12000, scoped, tag = 'internal scratch']
  %s0 = inlined_call_operand.vmem [shape: f32[2,8,32], index: 0, kind: input, shape index: {}]
  %s1 = inlined_call_operand.vmem [shape: f32[2,1,32], index: 1, kind: input, shape index: {}]
  %s2 = inlined_call_operand.vmem [shape: f32[32,32], index: 2, kind: input, shape index: {}]
  %s3 = inlined_call_operand.vmem [shape: f32[1,32], index: 3, kind: input, shape index: {}]
  %s4 = inlined_call_operand.vmem [shape: s32[2,1,8], index: 4, kind: input, shape index: {}]
  %s5 = inlined_call_operand.hbm [shape: f32[2,1,8], index: 5, kind: output, shape index: {}]
  %s6 = sld [smem:[#allocation0]]
  $region53: #{score_forward.1} parent=0
    _
  %s8 = ssub.s32 1, %s6
  %s9 = scalar_select 0, %s8, %s6
  $region1: #{score_forward.1} parent=0
    #allocation2 [shape = 'u8[1024]{0}', space=vmem, size = 0x400, scoped, tag = 'output window, operand 0']
    #allocation3 [shape = 's32[2]{0}', space=sflag, size = 0x8, scoped, tag = 'scoped memory for score_forward.1']
    %10 = vsyncpa [#allocation3], 0
    %s11 = scalar_lea.sflag [#allocation3], 1
    %12 = vsyncpa %s11, 0
    loop: start=0, step=1, limit=4
    $region2: #{score_forward.1} parent=1 // loop_pre_header
      _
    $region3: #{score_forward.1} parent=1 // loop_header
      %s14 = sphi 0, %s18
      %p15 = scmp.ge.s32.totalorder %s14, 4
      %s21 = sphi 0, %s33
      %s22 = sphi 0, %s29
      %s23 = sphi 0, %s21
      %s24 = sphi 0, %s22
      %s25 = sphi 0, %s23
      %s26 = sphi 0, %s24
      %s38 = sphi 0, %s40
      %s41 = sphi 0, %s38
      %s42 = sphi 0, %s41
      %s58 = sphi 0, %s42
      %s64 = sphi 0, %s66
      %s67 = sphi 0, %s64
      %s68 = sphi 0, %s67
      %s84 = sphi 0, %s68
      %s88 = sphi 0, %s88
      %s90 = sphi 0, %s88
      %s91 = sphi 0, %s90
      %s105 = sphi 0, %s91
      %s109 = sphi 0, %s109
      %s111 = sphi 0, %s109
      %s112 = sphi 0, %s111
      %s126 = sphi 0, %s112
      %s134 = sphi 0, %s136
      %s137 = sphi 0, %s134
      %s138 = sphi 0, %s137
      %s154 = sphi 0, %s138
      %s162 = sphi 0, %s164
      %s165 = sphi 0, %s162
      %s166 = sphi 0, %s165
      %s182 = sphi 0, %s166
    $region4: #{score_forward.1} parent=1 // loop_header_branch
      %17 = sbr.rel (%p15) target = $region8
    $region5: #{score_forward.1} parent=1 // loop_body
      %s19 = ssub.s32 %s14, 1
      %s20 = ssub.s32 %s14, 2
      %s27 = sadd.s32 1, %s22
      %p28 = scmp.ge.s32.totalorder %s27, 1
      %s29 = scalar_select %p28, 0, %s27
      %s30 = sadd.s32 1, %s21
      %s31 = scalar_select %p28, %s30, %s21
      %p32 = scmp.ge.s32.totalorder %s31, 2
      %s33 = scalar_select %p32, 0, %s31
      %s34 = ssub.s32 %s21, %s33
      %s35 = ssub.s32 %s22, %s29
      %s36 = sor.u32 %s34, %s35
      %p37 = scmp.eq.s32.totalorder %s36, 0
      %s39 = sadd.s32 %s38, 1
      %s40 = scalar_select %p37, %s38, %s39
      %p43 = pneg %p37
      %p44 = scmp.eq.s32.totalorder %s14, 1
      %p45 = por %p43, %p44
      %p46 = scmp.ne.s32.totalorder %s38, %s41
      %p47 = scmp.eq.s32.totalorder %s14, 0
      %p48 = por %p46, %p47
      %p49 = scmp.ne.s32.totalorder %s38, %s41
      %p50 = scmp.eq.s32.totalorder %s19, 1
      %p51 = por %p49, %p50
      %p52 = scmp.ne.s32.totalorder %s41, %s42
      %p53 = scmp.eq.s32.totalorder %s19, 0
      %p54 = por %p52, %p53
      %p55 = scmp.ne.s32.totalorder %s41, %s42
      %p56 = scmp.eq.s32.totalorder %s20, 1
      %p57 = por %p55, %p56
      %p59 = scmp.ne.s32.totalorder %s42, %s58
      %p60 = scmp.eq.s32.totalorder %s20, 0
      %p61 = por %p59, %p60
      %s62 = ssub.s32 %s21, %s33
      %p63 = scmp.eq.s32.totalorder %s62, 0
      %s65 = sadd.s32 %s64, 1
      %s66 = scalar_select %p63, %s64, %s65
      %p69 = pneg %p63
      %p70 = scmp.eq.s32.totalorder %s14, 1
      %p71 = por %p69, %p70
      %p72 = scmp.ne.s32.totalorder %s64, %s67
      %p73 = scmp.eq.s32.totalorder %s14, 0
      %p74 = por %p72, %p73
      %p75 = scmp.ne.s32.totalorder %s64, %s67
      %p76 = scmp.eq.s32.totalorder %s19, 1
      %p77 = por %p75, %p76
      %p78 = scmp.ne.s32.totalorder %s67, %s68
      %p79 = scmp.eq.s32.totalorder %s19, 0
      %p80 = por %p78, %p79
      %p81 = scmp.ne.s32.totalorder %s67, %s68
      %p82 = scmp.eq.s32.totalorder %s20, 1
      %p83 = por %p81, %p82
      %p85 = scmp.ne.s32.totalorder %s68, %s84
      %p86 = scmp.eq.s32.totalorder %s20, 0
      %p87 = por %p85, %p86
      %s89 = sadd.s32 %s88, 1
      %p92 = scmp.eq.s32.totalorder %s14, 1
      %p93 = scmp.ne.s32.totalorder %s88, %s90
      %p94 = scmp.eq.s32.totalorder %s14, 0
      %p95 = por %p93, %p94
      %p96 = scmp.ne.s32.totalorder %s88, %s90
      %p97 = scmp.eq.s32.totalorder %s19, 1
      %p98 = por %p96, %p97
      %p99 = scmp.ne.s32.totalorder %s90, %s91
      %p100 = scmp.eq.s32.totalorder %s19, 0
      %p101 = por %p99, %p100
      %p102 = scmp.ne.s32.totalorder %s90, %s91
      %p103 = scmp.eq.s32.totalorder %s20, 1
      %p104 = por %p102, %p103
      %p106 = scmp.ne.s32.totalorder %s91, %s105
      %p107 = scmp.eq.s32.totalorder %s20, 0
      %p108 = por %p106, %p107
      %s110 = sadd.s32 %s109, 1
      %p113 = scmp.eq.s32.totalorder %s14, 1
      %p114 = scmp.ne.s32.totalorder %s109, %s111
      %p115 = scmp.eq.s32.totalorder %s14, 0
      %p116 = por %p114, %p115
      %p117 = scmp.ne.s32.totalorder %s109, %s111
      %p118 = scmp.eq.s32.totalorder %s19, 1
      %p119 = por %p117, %p118
      %p120 = scmp.ne.s32.totalorder %s111, %s112
      %p121 = scmp.eq.s32.totalorder %s19, 0
      %p122 = por %p120, %p121
      %p123 = scmp.ne.s32.totalorder %s111, %s112
      %p124 = scmp.eq.s32.totalorder %s20, 1
      %p125 = por %p123, %p124
      %p127 = scmp.ne.s32.totalorder %s112, %s126
      %p128 = scmp.eq.s32.totalorder %s20, 0
      %p129 = por %p127, %p128
      %s130 = ssub.s32 %s21, %s33
      %s131 = ssub.s32 %s22, %s29
      %s132 = sor.u32 %s130, %s131
      %p133 = scmp.eq.s32.totalorder %s132, 0
      %s135 = sadd.s32 %s134, 1
      %s136 = scalar_select %p133, %s134, %s135
      %p139 = pneg %p133
      %p140 = scmp.eq.s32.totalorder %s14, 1
      %p141 = por %p139, %p140
      %p142 = scmp.ne.s32.totalorder %s134, %s137
      %p143 = scmp.eq.s32.totalorder %s14, 0
      %p144 = por %p142, %p143
      %p145 = scmp.ne.s32.totalorder %s134, %s137
      %p146 = scmp.eq.s32.totalorder %s19, 1
      %p147 = por %p145, %p146
      %p148 = scmp.ne.s32.totalorder %s137, %s138
      %p149 = scmp.eq.s32.totalorder %s19, 0
      %p150 = por %p148, %p149
      %p151 = scmp.ne.s32.totalorder %s137, %s138
      %p152 = scmp.eq.s32.totalorder %s20, 1
      %p153 = por %p151, %p152
      %p155 = scmp.ne.s32.totalorder %s138, %s154
      %p156 = scmp.eq.s32.totalorder %s20, 0
      %p157 = por %p155, %p156
      %s158 = ssub.s32 %s21, %s33
      %s159 = ssub.s32 %s22, %s29
      %s160 = sor.u32 %s158, %s159
      %p161 = scmp.eq.s32.totalorder %s160, 0
      %s163 = sadd.s32 %s162, 1
      %s164 = scalar_select %p161, %s162, %s163
      %p167 = pneg %p161
      %p168 = scmp.eq.s32.totalorder %s14, 1
      %p169 = por %p167, %p168
      %p170 = scmp.ne.s32.totalorder %s162, %s165
      %p171 = scmp.eq.s32.totalorder %s14, 0
      %p172 = por %p170, %p171
      %p173 = scmp.ne.s32.totalorder %s162, %s165
      %p174 = scmp.eq.s32.totalorder %s19, 1
      %p175 = por %p173, %p174
      %p176 = scmp.ne.s32.totalorder %s165, %s166
      %p177 = scmp.eq.s32.totalorder %s19, 0
      %p178 = por %p176, %p177
      %p179 = scmp.ne.s32.totalorder %s165, %s166
      %p180 = scmp.eq.s32.totalorder %s20, 1
      %p181 = por %p179, %p180
      %p183 = scmp.ne.s32.totalorder %s166, %s182
      %p184 = scmp.eq.s32.totalorder %s20, 0
      %p185 = por %p183, %p184
      %p186 = scmp.le.s32.totalorder 1, %s14
      %p187 = scmp.lt.s32.totalorder %s14, 3
      %p188 = pnand %p186, %p187
      %p189 = pneg %p188
      // Predicated region
      $region9: #{score_forward.1} parent=5 // pred_check
        _
      $region10: #{score_forward.1} parent=5 // pred_check_branch
        %191 = sbr.rel (%p188) target = $region12
      $region11: #{score_forward.1} parent=5 // pred_region
        %s192 = ssub.s32 %s14, 1
        // Predicated region
        $region13: #{score_forward.1} parent=11 // pred_check
          %p193 = pneg %p101
        $region14: #{score_forward.1} parent=11 // pred_check_branch
          %195 = sbr.rel (%p193) target = $region16
        $region15: #{score_forward.1} parent=11 // pred_region
          _
        $region16: #{score_forward.1} parent=11 // pred_fallthru
          _
        // Predicated region
        $region17: #{score_forward.1} parent=11 // pred_check
          %p196 = pneg %p122
        $region18: #{score_forward.1} parent=11 // pred_check_branch
          %198 = sbr.rel (%p196) target = $region20
        $region19: #{score_forward.1} parent=11 // pred_region
          _
        $region20: #{score_forward.1} parent=11 // pred_fallthru
          _
      $region12: #{score_forward.1} parent=5 // pred_fallthru
        _
      %p199 = scmp.lt.s32.totalorder %s14, 2
      // Predicated region
      $region21: #{score_forward.1} parent=5 // pred_check
        %p200 = pneg %p199
      $region22: #{score_forward.1} parent=5 // pred_check_branch
        %202 = sbr.rel (%p200) target = $region24
      $region23: #{score_forward.1} parent=5 // pred_region
        // Predicated region
        $region25: #{score_forward.1} parent=23 // pred_check
          %p203 = pneg %p48
        $region26: #{score_forward.1} parent=23 // pred_check_branch
          %205 = sbr.rel (%p203) target = $region28
        $region27: #{score_forward.1} parent=23 // pred_region
          %p206 = scmp.lt.s32.totalorder %s21, 1
          %s207 = scalar_select %p206, %s21, 1
          %p208 = scmp.lt.s32.totalorder %s22, 0
          %s209 = scalar_select %p208, %s22, 0
          %s210 = sadd.s32 %s209, %s207
          %s211 = smul.addr %s210, 8
          %s212 = scalar_lea.vmem %s0, %s211
        $region28: #{score_forward.1} parent=23 // pred_fallthru
          _
        // Predicated region
        $region29: #{score_forward.1} parent=23 // pred_check
          %p213 = pneg %p74
        $region30: #{score_forward.1} parent=23 // pred_check_branch
          %215 = sbr.rel (%p213) target = $region32
        $region31: #{score_forward.1} parent=23 // pred_region
          %p216 = scmp.lt.s32.totalorder %s21, 1
          %s217 = scalar_select %p216, %s21, 1
          %s218 = scalar_lea.vmem %s1, %s217
        $region32: #{score_forward.1} parent=23 // pred_fallthru
          _
        // Predicated region
        $region33: #{score_forward.1} parent=23 // pred_check
          %p219 = pneg %p144
        $region34: #{score_forward.1} parent=23 // pred_check_branch
          %221 = sbr.rel (%p219) target = $region36
        $region35: #{score_forward.1} parent=23 // pred_region
          %p222 = scmp.lt.s32.totalorder %s21, 1
          %s223 = scalar_select %p222, %s21, 1
          %p224 = scmp.lt.s32.totalorder %s22, 0
          %s225 = scalar_select %p224, %s22, 0
          %s226 = sadd.s32 %s225, %s223
          %s227 = scalar_lea.vmem %s4, %s226
        $region36: #{score_forward.1} parent=23 // pred_fallthru
          _
      $region24: #{score_forward.1} parent=5 // pred_fallthru
        _
      %p228 = scmp.le.s32.totalorder 1, %s14
      %p229 = scmp.lt.s32.totalorder %s14, 3
      %p230 = pnand %p228, %p229
      %p231 = pneg %p230
      // Predicated region
      $region37: #{score_forward.1} parent=5 // pred_check
        _
      $region38: #{score_forward.1} parent=5 // pred_check_branch
        %233 = sbr.rel (%p230) target = $region40
      $region39: #{score_forward.1} parent=5 // pred_region
        %s234 = ssub.s32 %s14, 1
        %p235 = scmp.lt.s32.totalorder %s23, 1
        %s236 = scalar_select %p235, %s23, 1
        %p237 = scmp.lt.s32.totalorder %s24, 0
        %s238 = scalar_select %p237, %s24, 0
        %s239 = sadd.s32 %s238, %s236
        %s240 = smul.addr %s239, 8
        %s241 = scalar_lea.vmem %s0, %s240
        %p242 = pneg %p54
        %p243 = pneg %p51
        %p244 = scmp.lt.s32.totalorder %s23, 1
        %s245 = scalar_select %p244, %s23, 1
        %s246 = scalar_lea.vmem %s1, %s245
        %p247 = pneg %p80
        %p248 = pneg %p77
        %p249 = pneg %p101
        %p250 = pneg %p98
        %p251 = pneg %p122
        %p252 = pneg %p119
        %p253 = scmp.lt.s32.totalorder %s23, 1
        %s254 = scalar_select %p253, %s23, 1
        %p255 = scmp.lt.s32.totalorder %s24, 0
        %s256 = scalar_select %p255, %s24, 0
        %s257 = sadd.s32 %s256, %s254
        %s258 = scalar_lea.vmem %s4, %s257
        %p259 = pneg %p150
        %p260 = pneg %p147
        %p261 = pneg %p178
        %p262 = pneg %p175
        %s263 = sand.u32 %s165, 1
        %s264 = scalar_lea.sflag [#allocation3], %s263
        %s265 = sand.u32 %s165, 1
        %s266 = scalar_lea.vmem [#allocation2], %s265
        %p267 = scmp.lt.s32.totalorder %s23, 1
        %s268 = scalar_select %p267, %s23, 1
        %p269 = scmp.lt.s32.totalorder %s24, 0
        %s270 = scalar_select %p269, %s24, 0
        %s271 = sadd.s32 %s270, %s268
        %s272 = smul.addr %s271, 8
        %s273 = scalar_lea.vmem %s0, %s272
        %p274 = scmp.lt.s32.totalorder %s23, 1
        %s275 = scalar_select %p274, %s23, 1
        %s276 = scalar_lea.vmem %s1, %s275
        %p277 = scmp.lt.s32.totalorder %s23, 1
        %s278 = scalar_select %p277, %s23, 1
        %p279 = scmp.lt.s32.totalorder %s24, 0
        %s280 = scalar_select %p279, %s24, 0
        %s281 = sadd.s32 %s280, %s278
        %s282 = scalar_lea.vmem %s4, %s281
        %v283 = vld [vmem:[%s273] sm:$0xff]
        %v284 = vld [vmem:[%s2] sm:$0xff]
        %v285 = vld [vmem:[%s2 + $0x8] sm:$0xff]
        %v286 = vld [vmem:[%s2 + $0x10] sm:$0xff]
        %v287 = vld [vmem:[%s2 + $0x18] sm:$0xff]
        %v288 = vld [vmem:[%s276] sm:$0x1]
        %v290 = vlaneseq
        %v291 = vshrl.u32 %v290, 7
        %v292 = vsub.s32 0, %v291
        %v293 = vrot.slane %v288, %v292
        %vm295 = vcmask 261120
        %v297 = vsel %vm295, %v283, 0
        %v300 = vsel %vm295, %v284, 0
        %v303 = vsel %vm295, %v285, 0
        %v306 = vsel %vm295, %v286, 0
        %v309 = vsel %vm295, %v287, 0
        %311 = vmatprep.subr.mxu0 0.0
        %312 = vmatpush1.xpose.msra.mxu0 %v300
        %313 = vmatprep.subr.mxu0 0.0
        %314 = vmatpush1.xpose.msra.mxu0 %v303
        %315 = vmatprep.subr.mxu0 0.0
        %316 = vmatpush1.xpose.msra.mxu0 %v306
        %317 = vmatprep.subr.mxu0 0.0
        %318 = vmatpush1.xpose.msra.mxu0 %v309
        %319 = vmatprep.subr.mxu0 0.0
        %320 = vmatpush1.xpose.msra.mxu0 0.0
        %321 = vmatprep.subr.mxu0 0.0
        %322 = vmatpush1.xpose.msra.mxu0 0.0
        %323 = vmatprep.subr.mxu0 0.0
        %324 = vmatpush1.xpose.msra.mxu0 0.0
        %325 = vmatprep.subr.mxu0 0.0
        %326 = vmatpush1.xpose.msra.mxu0 0.0
        %327 = vmatprep.subr.mxu0 0.0
        %328 = vmatpush1.xpose.msra.mxu0 0.0
        %329 = vmatprep.subr.mxu0 0.0
        %330 = vmatpush1.xpose.msra.mxu0 0.0
        %331 = vmatprep.subr.mxu0 0.0
        %332 = vmatpush1.xpose.msra.mxu0 0.0
        %333 = vmatprep.subr.mxu0 0.0
        %334 = vmatpush1.xpose.msra.mxu0 0.0
        %335 = vmatprep.subr.mxu0 0.0
        %336 = vmatpush1.xpose.msra.mxu0 0.0
        %337 = vmatprep.subr.mxu0 0.0
        %338 = vmatpush1.xpose.msra.mxu0 0.0
        %339 = vmatprep.subr.mxu0 0.0
        %340 = vmatpush1.xpose.msra.mxu0 0.0
        %341 = vmatprep.subr.mxu0 0.0
        %342 = vmatpush1.xpose.msra.mxu0 0.0
        %343 = vmatprep.subr.mxu0 0.0
        %344 = vmatpush1.xpose.msra.mxu0 0.0
        %345 = vmatprep.subr.mxu0 0.0
        %346 = vmatpush1.xpose.msra.mxu0 0.0
        %347 = vmatprep.subr.mxu0 0.0
        %348 = vmatpush1.xpose.msra.mxu0 0.0
        %349 = vmatprep.subr.mxu0 0.0
        %350 = vmatpush1.xpose.msra.mxu0 0.0
        %351 = vmatprep.subr.mxu0 0.0
        %352 = vmatpush1.xpose.msra.mxu0 0.0
        %353 = vmatprep.subr.mxu0 0.0
        %354 = vmatpush1.xpose.msra.mxu0 0.0
        %355 = vmatprep.subr.mxu0 0.0
        %356 = vmatpush1.xpose.msra.mxu0 0.0
        %357 = vmatprep.subr.mxu0 0.0
        %358 = vmatpush1.xpose.msra.mxu0 0.0
        %359 = vmatprep.subr.mxu0 0.0
        %360 = vmatpush1.xpose.msra.mxu0 0.0
        %361 = vmatprep.subr.mxu0 0.0
        %362 = vmatpush1.xpose.msra.mxu0 0.0
        %363 = vmatprep.subr.mxu0 0.0
        %364 = vmatpush1.xpose.msra.mxu0 0.0
        %365 = vmatprep.subr.mxu0 0.0
        %366 = vmatpush1.xpose.msra.mxu0 0.0
        %367 = vmatprep.subr.mxu0 0.0
        %368 = vmatpush1.xpose.msra.mxu0 0.0
        %369 = vmatprep.subr.mxu0 0.0
        %370 = vmatpush1.xpose.msra.mxu0 0.0
        %371 = vmatprep.subr.mxu0 0.0
        %372 = vmatpush1.xpose.msra.mxu0 0.0
        %373 = vmatprep.subr.mxu0 0.0
        %374 = vmatpush1.xpose.msra.mxu0 0.0
        %375 = vmatprep.mubr.f32.mxu0 0.0
        %376 = vmatmul.mubr.f32.gmra.mrb[0].mxu0 %v297
        %v377 = vpop.f32.mrb[0].mxu0
        %v378 = vadd.f32 %v293, %v377
        %v379 = vpop.f32.mrb[0].mxu0
        %380 = vdwg.mxu0
        %v381 = vtanh.pop %v378
        %v382 = vld [vmem:[%s3] sm:$0x1]
        %v384 = vsel %vm295, %v382, 0
        %v387 = vsel %vm295, %v381, 0
        %389 = vmatprep.subr.mxu0 0.0
        %390 = vmatpush1.xpose.msra.mxu0 %v387
        %391 = vmatprep.subr.mxu0 0.0
        %392 = vmatpush1.xpose.msra.mxu0 0.0
        %393 = vmatprep.subr.mxu0 0.0
        %394 = vmatpush1.xpose.msra.mxu0 0.0
        %395 = vmatprep.subr.mxu0 0.0
        %396 = vmatpush1.xpose.msra.mxu0 0.0
        %397 = vmatprep.subr.mxu0 0.0
        %398 = vmatpush1.xpose.msra.mxu0 0.0
        %399 = vmatprep.subr.mxu0 0.0
        %400 = vmatpush1.xpose.msra.mxu0 0.0
        %401 = vmatprep.subr.mxu0 0.0
        %402 = vmatpush1.xpose.msra.mxu0 0.0
        %403 = vmatprep.subr.mxu0 0.0
        %404 = vmatpush1.xpose.msra.mxu0 0.0
        %405 = vmatprep.subr.mxu0 0.0
        %406 = vmatpush1.xpose.msra.mxu0 0.0
        %407 = vmatprep.subr.mxu0 0.0
        %408 = vmatpush1.xpose.msra.mxu0 0.0
        %409 = vmatprep.subr.mxu0 0.0
        %410 = vmatpush1.xpose.msra.mxu0 0.0
        %411 = vmatprep.subr.mxu0 0.0
        %412 = vmatpush1.xpose.msra.mxu0 0.0
        %413 = vmatprep.subr.mxu0 0.0
        %414 = vmatpush1.xpose.msra.mxu0 0.0
        %415 = vmatprep.subr.mxu0 0.0
        %416 = vmatpush1.xpose.msra.mxu0 0.0
        %417 = vmatprep.subr.mxu0 0.0
        %418 = vmatpush1.xpose.msra.mxu0 0.0
        %419 = vmatprep.subr.mxu0 0.0
        %420 = vmatpush1.xpose.msra.mxu0 0.0
        %421 = vmatprep.subr.mxu0 0.0
        %422 = vmatpush1.xpose.msra.mxu0 0.0
        %423 = vmatprep.subr.mxu0 0.0
        %424 = vmatpush1.xpose.msra.mxu0 0.0
        %425 = vmatprep.subr.mxu0 0.0
        %426 = vmatpush1.xpose.msra.mxu0 0.0
        %427 = vmatprep.subr.mxu0 0.0
        %428 = vmatpush1.xpose.msra.mxu0 0.0
        %429 = vmatprep.subr.mxu0 0.0
        %430 = vmatpush1.xpose.msra.mxu0 0.0
        %431 = vmatprep.subr.mxu0 0.0
        %432 = vmatpush1.xpose.msra.mxu0 0.0
        %433 = vmatprep.subr.mxu0 0.0
        %434 = vmatpush1.xpose.msra.mxu0 0.0
        %435 = vmatprep.subr.mxu0 0.0
        %436 = vmatpush1.xpose.msra.mxu0 0.0
        %437 = vmatprep.subr.mxu0 0.0
        %438 = vmatpush1.xpose.msra.mxu0 0.0
        %439 = vmatprep.subr.mxu0 0.0
        %440 = vmatpush1.xpose.msra.mxu0 0.0
        %441 = vmatprep.subr.mxu0 0.0
        %442 = vmatpush1.xpose.msra.mxu0 0.0
        %443 = vmatprep.subr.mxu0 0.0
        %444 = vmatpush1.xpose.msra.mxu0 0.0
        %445 = vmatprep.subr.mxu0 0.0
        %446 = vmatpush1.xpose.msra.mxu0 0.0
        %447 = vmatprep.subr.mxu0 0.0
        %448 = vmatpush1.xpose.msra.mxu0 0.0
        %449 = vmatprep.subr.mxu0 0.0
        %450 = vmatpush1.xpose.msra.mxu0 0.0
        %451 = vmatprep.subr.mxu0 0.0
        %452 = vmatpush1.xpose.msra.mxu0 0.0
        %453 = vmatprep.mubr.f32.mxu0 0.0
        %454 = vmatmul.mubr.f32.gmra.mrb[0].mxu0 %v384
        %v455 = vpop.f32.mrb[0].mxu0
        %v456 = vadd.f32 0.0, %v455
        %v457 = vpop.f32.mrb[0].mxu0
        %458 = vdwg.mxu0
        %v459 = vld [vmem:[%s282] sm:$0x1]
        %vm460 = vcmp.ne.s32.totalorder %v459, 0
        %v461 = vsel %vm460, -1e+12, %v456
        %vm462 = vcmask 57344
        %463 = vst.msk [vmem:[%s266] sm:$0x1] %vm462, %v461
        %s464 = sand.u32 %s165, 1
        %s465 = scalar_lea.sflag [#allocation3], %s464
        %s466 = sand.u32 %s165, 1
        %s467 = scalar_lea.vmem [#allocation2], %s466
        // Predicated region
        $region41: #{score_forward.1} parent=39 // pred_check
          %p468 = pneg %p175
        $region42: #{score_forward.1} parent=39 // pred_check_branch
          %470 = sbr.rel (%p468) target = $region44
        $region43: #{score_forward.1} parent=39 // pred_region
          %s472 = ssub.s32 16, 16
          %473 = vsyncadd %s465, %s472
          %s474 = sadd.s32 %s24, %s23
          %s475 = smul.addr %s474, 16
          %s476 = scalar_lea.hbm %s5, %s475
          %s478 = sshll.u32 %s467, 4
          %s479 = int_to_ptr.vmem [resolvable:$true] %s478
          %481 = dma.vmem_to_hbm [thread:$0]  %s479, 16, %s476, %s465
        $region44: #{score_forward.1} parent=39 // pred_fallthru
          _
      $region40: #{score_forward.1} parent=5 // pred_fallthru
        _
      %p482 = scmp.le.s32.totalorder 2, %s14
      // Predicated region
      $region45: #{score_forward.1} parent=5 // pred_check
        %p483 = pneg %p482
      $region46: #{score_forward.1} parent=5 // pred_check_branch
        %485 = sbr.rel (%p483) target = $region48
      $region47: #{score_forward.1} parent=5 // pred_region
        %s486 = ssub.s32 %s14, 2
        // Predicated region
        $region49: #{score_forward.1} parent=47 // pred_check
          %p487 = pneg %p181
        $region50: #{score_forward.1} parent=47 // pred_check_branch
          %489 = sbr.rel (%p487) target = $region52
        $region51: #{score_forward.1} parent=47 // pred_region
          %s490 = sand.u32 %s166, 1
          %s491 = scalar_lea.sflag [#allocation3], %s490
          %s492 = sand.u32 %s166, 1
          %s493 = scalar_lea.vmem [#allocation2], %s492
          %494 = dma.done %s491, 16
        $region52: #{score_forward.1} parent=47 // pred_fallthru
          _
      $region48: #{score_forward.1} parent=5 // pred_fallthru
        _
    $region6: #{score_forward.1} parent=1 // loop_footer
      %s18 = sadd.s32 1, %s14
    $region7: #{score_forward.1} parent=1 // loop_footer_branch
      %13 = sbr.rel target = $region3
    $region8: #{score_forward.1} parent=1 // loop_exit
      _
    %495 = vsyncpa [#allocation3], 1
    %s496 = scalar_lea.sflag [#allocation3], 1
    %497 = vsyncpa %s496, 1

</llo_original>
